<compile_context>
chip_gen: v7x
topology: tpu7x:2x2x1
jax: 0.10.0
libtpu: 0.0.40
codegen_flags: <defaults>
</compile_context>

<pallas_src>
import functools

import jax
import jax.numpy as jnp
from jax import lax
from jax.experimental import pallas as pl
from jax.experimental.pallas import tpu as pltpu


def _round_up(n, m):
    return ((n + m - 1) // m) * m


def _autoencoder_kernel(x_ref,
                        w1_ref, b1_ref,
                        w2_ref, b2_ref,
                        w3_ref, b3_ref,
                        w4_ref, b4_ref,
                        out_ref, *, eps):
    """One (TB, Dp) batch tile: l2-normalize -> encoder MLP -> decoder MLP -> rescale."""
    x = x_ref[...]                                              # (TB, Dp) f32

    # --- encode: per-sample L2 normalization coefficient ---
    sumsq = jnp.sum(x * x, axis=-1, keepdims=True) + eps        # (TB, 1) f32
    l2 = jnp.sqrt(sumsq)                                        # kept for rescale
    inv_l2 = lax.rsqrt(sumsq)                                   # EUP, effectively free
    x_norm = (x * inv_l2).astype(jnp.bfloat16)                  # (TB, Dp) bf16

    h_enc = jnp.tanh(
        jnp.dot(x_norm, w1_ref[...], preferred_element_type=jnp.float32)
        + b1_ref[...])                                          # (TB, hidden) f32
    z = jnp.tanh(
        jnp.dot(h_enc.astype(jnp.bfloat16), w2_ref[...],
                preferred_element_type=jnp.float32)
        + b2_ref[...])                                          # (TB, bottleneck) f32

    # --- decode ---
    h_dec = jnp.tanh(
        jnp.dot(z.astype(jnp.bfloat16), w3_ref[...],
                preferred_element_type=jnp.float32)
        + b3_ref[...])                                          # (TB, hidden) f32
    y = (jnp.dot(h_dec.astype(jnp.bfloat16), w4_ref[...],
                 preferred_element_type=jnp.float32)
         + b4_ref[...])                                         # (TB, Dp) f32

    out_ref[...] = y * l2                                       # undo normalization


def init_params(key, d_in, hidden, bottleneck):
    """Synthetic params (nn.Linear shapes, stored (in, out)); weights bf16, biases f32."""
    ks = jax.random.split(key, 8)
    scale = 0.05

    def w(k, shape):
        return (scale * jax.random.normal(k, shape, jnp.float32)).astype(jnp.bfloat16)

    def b(k, shape):
        return scale * jax.random.normal(k, shape, jnp.float32)

    w1 = w(ks[0], (d_in, hidden));        b1 = b(ks[1], (1, hidden))
    w2 = w(ks[2], (hidden, bottleneck));  b2 = b(ks[3], (1, bottleneck))
    w3 = w(ks[4], (bottleneck, hidden));  b3 = b(ks[5], (1, hidden))
    w4 = w(ks[6], (hidden, d_in));        b4 = b(ks[7], (1, d_in))
    return (w1, b1, w2, b2, w3, b3, w4, b4)


def _choose_batch_tile(batch, d_pad, weight_bytes, budget_bytes=24 * 1024 * 1024):
    """Largest batch tile (multiple of 8, <=256) whose double-buffered x/out tiles fit."""
    tb = min(256, _round_up(max(batch, 1), 8))
    while tb > 8:
        tile_bytes = 2 * 2 * tb * d_pad * 4   # double-buffered f32 input + output block
        if tile_bytes + weight_bytes <= budget_bytes:
            break
        tb //= 2
    return max(_round_up(tb, 8), 8)


def spectrogram_autoencoder_forward(imgs, params, *, eps=1e-12):
    """imgs: (B, 1, H, W) float32 (NCHW, matching the PyTorch module)."""
    w1, b1, w2, b2, w3, b3, w4, b4 = params
    B, C, H, W = imgs.shape
    D = C * H * W
    hidden = w1.shape[1]
    bottleneck = w2.shape[1]

    # --- pad feature dim to a lane-dense multiple of 128 (zeros: math unaffected) ---
    Dp = _round_up(D, 128)
    x = imgs.reshape(B, D).astype(jnp.float32)
    if Dp != D:
        x = jnp.pad(x, ((0, 0), (0, Dp - D)))
        w1 = jnp.pad(w1, ((0, Dp - D), (0, 0)))
        w4 = jnp.pad(w4, ((0, 0), (0, Dp - D)))
        b4 = jnp.pad(b4, ((0, 0), (0, Dp - D)))

    weight_bytes = 2 * (w1.size + w2.size + w3.size + w4.size) \
        + 4 * (b1.size + b2.size + b3.size + b4.size)

    # --- batch tiling (pipelined grid axis); pad B so every tile is full ---
    TB = _choose_batch_tile(B, Dp, weight_bytes)
    Bp = _round_up(B, TB)
    if Bp != B:
        x = jnp.pad(x, ((0, Bp - B), (0, 0)))   # zero rows; eps keeps them finite
    grid = (Bp // TB,)

    x_spec = pl.BlockSpec((TB, Dp), lambda i: (i, 0))
    out_spec = pl.BlockSpec((TB, Dp), lambda i: (i, 0))
    # Weights / biases: constant index_map -> fetched once, resident across tiles.
    const = lambda i: (0, 0)
    w_specs = [
        pl.BlockSpec((Dp, hidden), const),      # w1
        pl.BlockSpec((1, hidden), const),       # b1
        pl.BlockSpec((hidden, bottleneck), const),  # w2
        pl.BlockSpec((1, bottleneck), const),   # b2
        pl.BlockSpec((bottleneck, hidden), const),  # w3
        pl.BlockSpec((1, hidden), const),       # b3
        pl.BlockSpec((hidden, Dp), const),      # w4
        pl.BlockSpec((1, Dp), const),           # b4
    ]

    # VMEM budget: only raise the scoped limit if the estimate exceeds the default.
    est_vmem = 2 * 2 * TB * Dp * 4 + 2 * weight_bytes + (1 << 20)
    cp_kwargs = dict(dimension_semantics=("parallel",))
    if est_vmem > (32 << 20):
        cp_kwargs["vmem_limit_bytes"] = min(est_vmem, 64 << 20)
    compiler_params = pltpu.CompilerParams(**cp_kwargs)

    out = pl.pallas_call(
        functools.partial(_autoencoder_kernel, eps=eps),
        out_shape=jax.ShapeDtypeStruct((Bp, Dp), jnp.float32),
        grid=grid,
        in_specs=[x_spec] + w_specs,
        out_specs=out_spec,
        compiler_params=compiler_params,
    )(x, w1, b1, w2, b2, w3, b3, w4, b4)

    return out[:B, :D].reshape(B, C, H, W)


def _reference_forward(imgs, params, *, eps=1e-12):
    """Pure-JAX reference with the same bf16-weight / f32-accumulate semantics."""
    w1, b1, w2, b2, w3, b3, w4, b4 = params
    B, C, H, W = imgs.shape
    x = imgs.reshape(B, C * H * W).astype(jnp.float32)
    sumsq = jnp.sum(x * x, axis=-1, keepdims=True) + eps
    l2 = jnp.sqrt(sumsq)
    xn = (x / l2).astype(jnp.bfloat16)
    h = jnp.tanh(jnp.dot(xn, w1, preferred_element_type=jnp.float32) + b1)
    z = jnp.tanh(jnp.dot(h.astype(jnp.bfloat16), w2,
                         preferred_element_type=jnp.float32) + b2)
    h2 = jnp.tanh(jnp.dot(z.astype(jnp.bfloat16), w3,
                          preferred_element_type=jnp.float32) + b3)
    y = jnp.dot(h2.astype(jnp.bfloat16), w4,
                preferred_element_type=jnp.float32) + b4
    return (y * l2).reshape(B, C, H, W)


if __name__ == "__main__":
    B, C, H, W = 2, 1, 16, 16            # (batch, 1, width, height) per the docstring
    HIDDEN, BOTTLENECK = 32, 16
    D = C * H * W

    key = jax.random.PRNGKey(0)
    k_img, k_param = jax.random.split(key)
    imgs = jax.random.uniform(k_img, (B, C, H, W), jnp.float32)   # spectrogram-like, >= 0
    params = init_params(k_param, D, HIDDEN, BOTTLENECK)

    out = jax.block_until_ready(spectrogram_autoencoder_forward(imgs, params))
    ref = _reference_forward(imgs, params)

    assert out.shape == (B, C, H, W), out.shape
    max_err = float(jnp.max(jnp.abs(out - ref)))
    assert jnp.allclose(out, ref, atol=2e-3, rtol=2e-2), f"mismatch vs reference: {max_err}"

    print("KERNEL_OK")
</pallas_src>

<mosaic_0001>
module attributes {stable_mosaic.version = 11 : i64} {
  func.func @_autoencoder_kernel(%arg0: i32, %arg1: memref<8x256xf32, #tpu.memory_space<vmem>>, %arg2: memref<256x32xbf16, #tpu.memory_space<vmem>>, %arg3: memref<1x32xf32, #tpu.memory_space<vmem>>, %arg4: memref<32x16xbf16, #tpu.memory_space<vmem>>, %arg5: memref<1x16xf32, #tpu.memory_space<vmem>>, %arg6: memref<16x32xbf16, #tpu.memory_space<vmem>>, %arg7: memref<1x32xf32, #tpu.memory_space<vmem>>, %arg8: memref<32x256xbf16, #tpu.memory_space<vmem>>, %arg9: memref<1x256xf32, #tpu.memory_space<vmem>>, %arg10: memref<8x256xf32, #tpu.memory_space<vmem>>) attributes {dimension_semantics = [#tpu.dimension_semantics<parallel>], iteration_bounds = array<i64: 1>, scalar_prefetch = 0 : i64, scratch_operands = 0 : i64, tpu.core_type = #tpu.core_type<tc>, window_params = [{transform_indices = @transform_0, window_bounds = array<i64: 8, 256>}, {pipeline_mode = #tpu.pipeline_mode<synchronous>, transform_indices = @transform_1, window_bounds = array<i64: 256, 32>}, {pipeline_mode = #tpu.pipeline_mode<synchronous>, transform_indices = @transform_2, window_bounds = array<i64: 1, 32>}, {pipeline_mode = #tpu.pipeline_mode<synchronous>, transform_indices = @transform_3, window_bounds = array<i64: 32, 16>}, {pipeline_mode = #tpu.pipeline_mode<synchronous>, transform_indices = @transform_4, window_bounds = array<i64: 1, 16>}, {pipeline_mode = #tpu.pipeline_mode<synchronous>, transform_indices = @transform_5, window_bounds = array<i64: 16, 32>}, {pipeline_mode = #tpu.pipeline_mode<synchronous>, transform_indices = @transform_6, window_bounds = array<i64: 1, 32>}, {pipeline_mode = #tpu.pipeline_mode<synchronous>, transform_indices = @transform_7, window_bounds = array<i64: 32, 256>}, {pipeline_mode = #tpu.pipeline_mode<synchronous>, transform_indices = @transform_8, window_bounds = array<i64: 1, 256>}, {transform_indices = @transform_9, window_bounds = array<i64: 8, 256>}]} {
    %c0 = arith.constant 0 : index
    %c0_0 = arith.constant 0 : index
    %0 = vector.load %arg1[%c0, %c0_0] : memref<8x256xf32, #tpu.memory_space<vmem>>, vector<8x256xf32>
    %1 = arith.mulf %0, %0 : vector<8x256xf32>
    %cst = arith.constant dense<0.000000e+00> : vector<8xf32>
    %2 = vector.multi_reduction <add>, %1, %cst [1] : vector<8x256xf32> to vector<8xf32>
    %3 = vector.shape_cast %2 : vector<8xf32> to vector<8x1xf32>
    %cst_1 = arith.constant 9.99999996E-13 : f32
    %4 = vector.broadcast %cst_1 : f32 to vector<8x1xf32>
    %5 = arith.addf %3, %4 : vector<8x1xf32>
    %6 = math.sqrt %5 : vector<8x1xf32>
    %7 = math.rsqrt %5 : vector<8x1xf32>
    %8 = vector.broadcast %7 : vector<8x1xf32> to vector<8x256xf32>
    %9 = arith.mulf %0, %8 : vector<8x256xf32>
    %10 = arith.truncf %9 : vector<8x256xf32> to vector<8x256xbf16>
    %c0_2 = arith.constant 0 : index
    %c0_3 = arith.constant 0 : index
    %11 = vector.load %arg2[%c0_2, %c0_3] : memref<256x32xbf16, #tpu.memory_space<vmem>>, vector<256x32xbf16>
    %cst_4 = arith.constant dense<0.000000e+00> : vector<8x32xf32>
    %12 = tpu.matmul %10, %11, %cst_4 {dimension_numbers = #tpu.dot_dimension_numbers<[1], [0], [0], [1], [0, 0, 1, 1], [], []>} : vector<8x256xbf16>, vector<256x32xbf16>, vector<8x32xf32> -> vector<8x32xf32>
    %c0_5 = arith.constant 0 : index
    %c0_6 = arith.constant 0 : index
    %13 = vector.load %arg3[%c0_5, %c0_6] : memref<1x32xf32, #tpu.memory_space<vmem>>, vector<1x32xf32>
    %14 = vector.broadcast %13 : vector<1x32xf32> to vector<8x32xf32>
    %15 = arith.addf %12, %14 : vector<8x32xf32>
    %16 = math.tanh %15 : vector<8x32xf32>
    %17 = arith.truncf %16 : vector<8x32xf32> to vector<8x32xbf16>
    %c0_7 = arith.constant 0 : index
    %c0_8 = arith.constant 0 : index
    %18 = vector.load %arg4[%c0_7, %c0_8] : memref<32x16xbf16, #tpu.memory_space<vmem>>, vector<32x16xbf16>
    %cst_9 = arith.constant dense<0.000000e+00> : vector<8x16xf32>
    %19 = tpu.matmul %17, %18, %cst_9 {dimension_numbers = #tpu.dot_dimension_numbers<[1], [0], [0], [1], [0, 0, 1, 1], [], []>} : vector<8x32xbf16>, vector<32x16xbf16>, vector<8x16xf32> -> vector<8x16xf32>
    %c0_10 = arith.constant 0 : index
    %c0_11 = arith.constant 0 : index
    %20 = vector.load %arg5[%c0_10, %c0_11] : memref<1x16xf32, #tpu.memory_space<vmem>>, vector<1x16xf32>
    %21 = vector.broadcast %20 : vector<1x16xf32> to vector<8x16xf32>
    %22 = arith.addf %19, %21 : vector<8x16xf32>
    %23 = math.tanh %22 : vector<8x16xf32>
    %24 = arith.truncf %23 : vector<8x16xf32> to vector<8x16xbf16>
    %c0_12 = arith.constant 0 : index
    %c0_13 = arith.constant 0 : index
    %25 = vector.load %arg6[%c0_12, %c0_13] : memref<16x32xbf16, #tpu.memory_space<vmem>>, vector<16x32xbf16>
    %cst_14 = arith.constant dense<0.000000e+00> : vector<8x32xf32>
    %26 = tpu.matmul %24, %25, %cst_14 {dimension_numbers = #tpu.dot_dimension_numbers<[1], [0], [0], [1], [0, 0, 1, 1], [], []>} : vector<8x16xbf16>, vector<16x32xbf16>, vector<8x32xf32> -> vector<8x32xf32>
    %c0_15 = arith.constant 0 : index
    %c0_16 = arith.constant 0 : index
    %27 = vector.load %arg7[%c0_15, %c0_16] : memref<1x32xf32, #tpu.memory_space<vmem>>, vector<1x32xf32>
    %28 = vector.broadcast %27 : vector<1x32xf32> to vector<8x32xf32>
    %29 = arith.addf %26, %28 : vector<8x32xf32>
    %30 = math.tanh %29 : vector<8x32xf32>
    %31 = arith.truncf %30 : vector<8x32xf32> to vector<8x32xbf16>
    %c0_17 = arith.constant 0 : index
    %c0_18 = arith.constant 0 : index
    %32 = vector.load %arg8[%c0_17, %c0_18] : memref<32x256xbf16, #tpu.memory_space<vmem>>, vector<32x256xbf16>
    %cst_19 = arith.constant dense<0.000000e+00> : vector<8x256xf32>
    %33 = tpu.matmul %31, %32, %cst_19 {dimension_numbers = #tpu.dot_dimension_numbers<[1], [0], [0], [1], [0, 0, 1, 1], [], []>} : vector<8x32xbf16>, vector<32x256xbf16>, vector<8x256xf32> -> vector<8x256xf32>
    %c0_20 = arith.constant 0 : index
    %c0_21 = arith.constant 0 : index
    %34 = vector.load %arg9[%c0_20, %c0_21] : memref<1x256xf32, #tpu.memory_space<vmem>>, vector<1x256xf32>
    %35 = vector.broadcast %34 : vector<1x256xf32> to vector<8x256xf32>
    %36 = arith.addf %33, %35 : vector<8x256xf32>
    %37 = vector.broadcast %6 : vector<8x1xf32> to vector<8x256xf32>
    %38 = arith.mulf %36, %37 : vector<8x256xf32>
    %c0_22 = arith.constant 0 : index
    %c0_23 = arith.constant 0 : index
    %39 = vector.load %arg10[%c0_22, %c0_23] : memref<8x256xf32, #tpu.memory_space<vmem>>, vector<8x256xf32>
    tpu.vector_store %arg10[%c0_22, %c0_23], %38 {strides = array<i32>} : memref<8x256xf32, #tpu.memory_space<vmem>>, vector<8x256xf32>,
    return
  }
  func.func @transform_0(%arg0: i32) -> (i32, i32) {
    %c0_i32 = arith.constant 0 : i32
    %c0_i32_0 = arith.constant 0 : i32
    return %arg0, %c0_i32 : i32, i32
  }
  func.func @transform_1(%arg0: i32) -> (i32, i32) {
    %c0_i32 = arith.constant 0 : i32
    %c0_i32_0 = arith.constant 0 : i32
    %c0_i32_1 = arith.constant 0 : i32
    return %c0_i32, %c0_i32_0 : i32, i32
  }
  func.func @transform_2(%arg0: i32) -> (i32, i32) {
    %c0_i32 = arith.constant 0 : i32
    %c0_i32_0 = arith.constant 0 : i32
    %c0_i32_1 = arith.constant 0 : i32
    return %c0_i32, %c0_i32_0 : i32, i32
  }
  func.func @transform_3(%arg0: i32) -> (i32, i32) {
    %c0_i32 = arith.constant 0 : i32
    %c0_i32_0 = arith.constant 0 : i32
    %c0_i32_1 = arith.constant 0 : i32
    return %c0_i32, %c0_i32_0 : i32, i32
  }
  func.func @transform_4(%arg0: i32) -> (i32, i32) {
    %c0_i32 = arith.constant 0 : i32
    %c0_i32_0 = arith.constant 0 : i32
    %c0_i32_1 = arith.constant 0 : i32
    return %c0_i32, %c0_i32_0 : i32, i32
  }
  func.func @transform_5(%arg0: i32) -> (i32, i32) {
    %c0_i32 = arith.constant 0 : i32
    %c0_i32_0 = arith.constant 0 : i32
    %c0_i32_1 = arith.constant 0 : i32
    return %c0_i32, %c0_i32_0 : i32, i32
  }
  func.func @transform_6(%arg0: i32) -> (i32, i32) {
    %c0_i32 = arith.constant 0 : i32
    %c0_i32_0 = arith.constant 0 : i32
    %c0_i32_1 = arith.constant 0 : i32
    return %c0_i32, %c0_i32_0 : i32, i32
  }
  func.func @transform_7(%arg0: i32) -> (i32, i32) {
    %c0_i32 = arith.constant 0 : i32
    %c0_i32_0 = arith.constant 0 : i32
    %c0_i32_1 = arith.constant 0 : i32
    return %c0_i32, %c0_i32_0 : i32, i32
  }
  func.func @transform_8(%arg0: i32) -> (i32, i32) {
    %c0_i32 = arith.constant 0 : i32
    %c0_i32_0 = arith.constant 0 : i32
    %c0_i32_1 = arith.constant 0 : i32
    return %c0_i32, %c0_i32_0 : i32, i32
  }
  func.func @transform_9(%arg0: i32) -> (i32, i32) {
    %c0_i32 = arith.constant 0 : i32
    %c0_i32_0 = arith.constant 0 : i32
    return %arg0, %c0_i32 : i32, i32
  }
}

</mosaic_0001>

<llo_original>
// kernel: tpu_custom_call.1
$region0: #{tpu_custom_call.1}
  #allocation0 [shape = 'u32[]', space=smem, size = 0x4, offset = 0x4, fixed_abs, tag = 'smem constant byte address 0x4 - core index']
  #allocation1 [shape = 'u32[144,128]{1,0:T(1,128)}', space=vmem, size = 0x12000, scoped, tag = 'internal scratch']
  %s0 = inlined_call_operand.vmem [shape: f32[8,256], index: 0, kind: input, shape index: {}]
  %s1 = inlined_call_operand.vmem [shape: bf16[256,32], index: 1, kind: input, shape index: {}]
  %s2 = inlined_call_operand.vmem [shape: f32[1,32], index: 2, kind: input, shape index: {}]
  %s3 = inlined_call_operand.vmem [shape: bf16[32,16], index: 3, kind: input, shape index: {}]
  %s4 = inlined_call_operand.vmem [shape: f32[1,16], index: 4, kind: input, shape index: {}]
  %s5 = inlined_call_operand.vmem [shape: bf16[16,32], index: 5, kind: input, shape index: {}]
  %s6 = inlined_call_operand.vmem [shape: f32[1,32], index: 6, kind: input, shape index: {}]
  %s7 = inlined_call_operand.vmem [shape: bf16[32,256], index: 7, kind: input, shape index: {}]
  %s8 = inlined_call_operand.vmem [shape: f32[1,256], index: 8, kind: input, shape index: {}]
  %s9 = inlined_call_operand.hbm [shape: f32[8,256], index: 9, kind: output, shape index: {}]
  %s10 = sld [smem:[#allocation0]]
  $region46: #{tpu_custom_call.1} parent=0
    _
  %s12 = ssub.s32 1, %s10
  %s13 = scalar_select 0, %s12, %s10
  $region1: #{tpu_custom_call.1} parent=0
    #allocation2 [shape = 'u8[8192]{0}', space=vmem, size = 0x2000, scoped, tag = 'output window, operand 0, single buffered']
    #allocation3 [shape = 's32[1]{0}', space=sflag, size = 0x4, scoped, tag = 'scoped memory for tpu_custom_call.1']
    %14 = vsyncpa [#allocation3], 0
    // Predicated region
    $region2: #{tpu_custom_call.1} parent=1 // pred_check
      _
    $region3: #{tpu_custom_call.1} parent=1 // pred_check_branch
      %16 = sbr.rel (0) target = $region5
    $region4: #{tpu_custom_call.1} parent=1 // pred_region
      _
    $region5: #{tpu_custom_call.1} parent=1 // pred_fallthru
      _
    // Predicated region
    $region6: #{tpu_custom_call.1} parent=1 // pred_check
      _
    $region7: #{tpu_custom_call.1} parent=1 // pred_check_branch
      %18 = sbr.rel (0) target = $region9
    $region8: #{tpu_custom_call.1} parent=1 // pred_region
      _
    $region9: #{tpu_custom_call.1} parent=1 // pred_fallthru
      _
    // Predicated region
    $region10: #{tpu_custom_call.1} parent=1 // pred_check
      _
    $region11: #{tpu_custom_call.1} parent=1 // pred_check_branch
      %20 = sbr.rel (0) target = $region13
    $region12: #{tpu_custom_call.1} parent=1 // pred_region
      _
    $region13: #{tpu_custom_call.1} parent=1 // pred_fallthru
      _
    // Predicated region
    $region14: #{tpu_custom_call.1} parent=1 // pred_check
      _
    $region15: #{tpu_custom_call.1} parent=1 // pred_check_branch
      %22 = sbr.rel (0) target = $region17
    $region16: #{tpu_custom_call.1} parent=1 // pred_region
      _
    $region17: #{tpu_custom_call.1} parent=1 // pred_fallthru
      _
    // Predicated region
    $region18: #{tpu_custom_call.1} parent=1 // pred_check
      _
    $region19: #{tpu_custom_call.1} parent=1 // pred_check_branch
      %24 = sbr.rel (0) target = $region21
    $region20: #{tpu_custom_call.1} parent=1 // pred_region
      _
    $region21: #{tpu_custom_call.1} parent=1 // pred_fallthru
      _
    // Predicated region
    $region22: #{tpu_custom_call.1} parent=1 // pred_check
      _
    $region23: #{tpu_custom_call.1} parent=1 // pred_check_branch
      %26 = sbr.rel (0) target = $region25
    $region24: #{tpu_custom_call.1} parent=1 // pred_region
      _
    $region25: #{tpu_custom_call.1} parent=1 // pred_fallthru
      _
    // Predicated region
    $region26: #{tpu_custom_call.1} parent=1 // pred_check
      _
    $region27: #{tpu_custom_call.1} parent=1 // pred_check_branch
      %28 = sbr.rel (0) target = $region29
    $region28: #{tpu_custom_call.1} parent=1 // pred_region
      _
    $region29: #{tpu_custom_call.1} parent=1 // pred_fallthru
      _
    // Predicated region
    $region30: #{tpu_custom_call.1} parent=1 // pred_check
      _
    $region31: #{tpu_custom_call.1} parent=1 // pred_check_branch
      %30 = sbr.rel (0) target = $region33
    $region32: #{tpu_custom_call.1} parent=1 // pred_region
      _
    $region33: #{tpu_custom_call.1} parent=1 // pred_fallthru
      _
    // Predicated region
    $region34: #{tpu_custom_call.1} parent=1 // pred_check
      _
    $region35: #{tpu_custom_call.1} parent=1 // pred_check_branch
      %32 = sbr.rel (0) target = $region37
    $region36: #{tpu_custom_call.1} parent=1 // pred_region
      _
    $region37: #{tpu_custom_call.1} parent=1 // pred_fallthru
      _
    %v34 = vld [vmem:[%s0] sm:$0xff]
    %v35 = vld [vmem:[%s0 + $0x8] sm:$0xff]
    %v36 = vmul.f32 %v34, %v34
    %v37 = vmul.f32 %v35, %v35
    %v38 = vadd.f32 %v36, %v37
    %39 = vadd.xlane.f32.xlu0 %v38
    %v40 = vpop.xlane.xlu0 %39
    %v41 = vadd.f32 %v40, 1e-12
    %v42 = vrsqrt.pop %v41
    %v43 = vmul.f32 %v41, %v42
    %vm44 = vcmp.eq.f32.partialorder %v41, inf
    %v45 = vsel %vm44, %v41, %v43
    %vm46 = vcmp.eq.f32.partialorder %v41, 0.0
    %v47 = vand.u32 %v41, 2147483648
    %v48 = vsel %vm46, %v47, %v45
    %v49 = vrsqrt.pop %v41
    %v50 = vmul.f32 %v34, %v49
    %v51 = vmul.f32 %v35, %v49
    %v52 = vpack.c.bf16 %v50, %v50
    %v53 = vpack.c.bf16 %v51, %v51
    %v54 = vld [vmem:[%s1] sm:$0xf]
    %v55 = vld [vmem:[%s1 + $0x4] sm:$0xf]
    %v56 = vld [vmem:[%s1 + $0x8] sm:$0xf]
    %v57 = vld [vmem:[%s1 + $0xc] sm:$0xf]
    %v58 = vld [vmem:[%s1 + $0x10] sm:$0xf]
    %v59 = vld [vmem:[%s1 + $0x14] sm:$0xf]
    %v60 = vld [vmem:[%s1 + $0x18] sm:$0xf]
    %v61 = vld [vmem:[%s1 + $0x1c] sm:$0xf]
    %v62 = vld [vmem:[%s1 + $0x20] sm:$0xf]
    %v63 = vld [vmem:[%s1 + $0x24] sm:$0xf]
    %v64 = vld [vmem:[%s1 + $0x28] sm:$0xf]
    %v65 = vld [vmem:[%s1 + $0x2c] sm:$0xf]
    %v66 = vld [vmem:[%s1 + $0x30] sm:$0xf]
    %v67 = vld [vmem:[%s1 + $0x34] sm:$0xf]
    %v68 = vld [vmem:[%s1 + $0x38] sm:$0xf]
    %v69 = vld [vmem:[%s1 + $0x3c] sm:$0xf]
    %v70 = vld [vmem:[%s1 + $0x40] sm:$0xf]
    %v71 = vld [vmem:[%s1 + $0x44] sm:$0xf]
    %v72 = vld [vmem:[%s1 + $0x48] sm:$0xf]
    %v73 = vld [vmem:[%s1 + $0x4c] sm:$0xf]
    %v74 = vld [vmem:[%s1 + $0x50] sm:$0xf]
    %v75 = vld [vmem:[%s1 + $0x54] sm:$0xf]
    %v76 = vld [vmem:[%s1 + $0x58] sm:$0xf]
    %v77 = vld [vmem:[%s1 + $0x5c] sm:$0xf]
    %v78 = vld [vmem:[%s1 + $0x60] sm:$0xf]
    %v79 = vld [vmem:[%s1 + $0x64] sm:$0xf]
    %v80 = vld [vmem:[%s1 + $0x68] sm:$0xf]
    %v81 = vld [vmem:[%s1 + $0x6c] sm:$0xf]
    %v82 = vld [vmem:[%s1 + $0x70] sm:$0xf]
    %v83 = vld [vmem:[%s1 + $0x74] sm:$0xf]
    %v84 = vld [vmem:[%s1 + $0x78] sm:$0xf]
    %v85 = vld [vmem:[%s1 + $0x7c] sm:$0xf]
    %v86 = vld [vmem:[%s2] sm:$0x1]
    %v88 = vlaneseq
    %v89 = vshrl.u32 %v88, 7
    %v90 = vsub.s32 0, %v89
    %v91 = vrot.slane %v86, %v90
    %v125 = vunpack.c.l.b16 %v54
    %v126 = vunpack.c.l.b16 %v55
    %v127 = vunpack.c.l.b16 %v56
    %v128 = vunpack.c.l.b16 %v57
    %v129 = vunpack.c.l.b16 %v58
    %v130 = vunpack.c.l.b16 %v59
    %v131 = vunpack.c.l.b16 %v60
    %v132 = vunpack.c.l.b16 %v61
    %v133 = vunpack.c.l.b16 %v62
    %v134 = vunpack.c.l.b16 %v63
    %v135 = vunpack.c.l.b16 %v64
    %v136 = vunpack.c.l.b16 %v65
    %v137 = vunpack.c.l.b16 %v66
    %v138 = vunpack.c.l.b16 %v67
    %v139 = vunpack.c.l.b16 %v68
    %v140 = vunpack.c.l.b16 %v69
    %v141 = vunpack.c.l.b16 %v70
    %v142 = vunpack.c.l.b16 %v71
    %v143 = vunpack.c.l.b16 %v72
    %v144 = vunpack.c.l.b16 %v73
    %v145 = vunpack.c.l.b16 %v74
    %v146 = vunpack.c.l.b16 %v75
    %v147 = vunpack.c.l.b16 %v76
    %v148 = vunpack.c.l.b16 %v77
    %v149 = vunpack.c.l.b16 %v78
    %v150 = vunpack.c.l.b16 %v79
    %v151 = vunpack.c.l.b16 %v80
    %v152 = vunpack.c.l.b16 %v81
    %v153 = vunpack.c.l.b16 %v82
    %v154 = vunpack.c.l.b16 %v83
    %v155 = vunpack.c.l.b16 %v84
    %v156 = vunpack.c.l.b16 %v85
    %v157 = vpack.c.b16 %v126, %v125
    %v158 = vpack.c.b16 %v128, %v127
    %v159 = vpack.c.b16 %v130, %v129
    %v160 = vpack.c.b16 %v132, %v131
    %v161 = vpack.c.b16 %v134, %v133
    %v162 = vpack.c.b16 %v136, %v135
    %v163 = vpack.c.b16 %v138, %v137
    %v164 = vpack.c.b16 %v140, %v139
    %v165 = vpack.c.b16 %v142, %v141
    %v166 = vpack.c.b16 %v144, %v143
    %v167 = vpack.c.b16 %v146, %v145
    %v168 = vpack.c.b16 %v148, %v147
    %v169 = vpack.c.b16 %v150, %v149
    %v170 = vpack.c.b16 %v152, %v151
    %v171 = vpack.c.b16 %v154, %v153
    %v172 = vpack.c.b16 %v156, %v155
    %189 = vmatprep.subr.bf16.mxu0 0
    %190 = vmatpush1.bf16.msra.mxu0 %v157
    %191 = vmatprep.subr.bf16.mxu0 0
    %192 = vmatpush1.bf16.msra.mxu0 %v158
    %193 = vmatprep.subr.bf16.mxu0 0
    %194 = vmatpush1.bf16.msra.mxu0 %v159
    %195 = vmatprep.subr.bf16.mxu0 0
    %196 = vmatpush1.bf16.msra.mxu0 %v160
    %197 = vmatprep.subr.bf16.mxu0 0
    %198 = vmatpush1.bf16.msra.mxu0 %v161
    %199 = vmatprep.subr.bf16.mxu0 0
    %200 = vmatpush1.bf16.msra.mxu0 %v162
    %201 = vmatprep.subr.bf16.mxu0 0
    %202 = vmatpush1.bf16.msra.mxu0 %v163
    %203 = vmatprep.subr.bf16.mxu0 0
    %204 = vmatpush1.bf16.msra.mxu0 %v164
    %205 = vmatprep.subr.bf16.mxu0 0
    %206 = vmatpush1.bf16.msra.mxu0 %v165
    %207 = vmatprep.subr.bf16.mxu0 0
    %208 = vmatpush1.bf16.msra.mxu0 %v166
    %209 = vmatprep.subr.bf16.mxu0 0
    %210 = vmatpush1.bf16.msra.mxu0 %v167
    %211 = vmatprep.subr.bf16.mxu0 0
    %212 = vmatpush1.bf16.msra.mxu0 %v168
    %213 = vmatprep.subr.bf16.mxu0 0
    %214 = vmatpush1.bf16.msra.mxu0 %v169
    %215 = vmatprep.subr.bf16.mxu0 0
    %216 = vmatpush1.bf16.msra.mxu0 %v170
    %217 = vmatprep.subr.bf16.mxu0 0
    %218 = vmatpush1.bf16.msra.mxu0 %v171
    %219 = vmatprep.subr.bf16.mxu0 0
    %220 = vmatpush1.bf16.msra.mxu0 %v172
    %221 = vmatprep.mubr.bf16.mxu0 %v53
    %222 = vmatmul.mubr.bf16.gmra.mrb[0].mxu0 %v52
    %v223 = vpop.f32.mrb[0].mxu0
    %v224 = vadd.f32 %v91, %v223
    %v225 = vpop.f32.mrb[0].mxu0
    %v226 = vpop.f32.mrb[0].mxu0
    %v227 = vpop.f32.mrb[0].mxu0
    %228 = vdwg.mxu0
    %v229 = vtanh.pop %v224
    %v230 = vpack.c.bf16 %v229, %v229
    %v231 = vld [vmem:[%s3] sm:$0xf]
    %v232 = vld [vmem:[%s3 + $0x4] sm:$0xf]
    %v233 = vld [vmem:[%s3 + $0x8] sm:$0xf]
    %v234 = vld [vmem:[%s3 + $0xc] sm:$0xf]
    %v235 = vld [vmem:[%s4] sm:$0x1]
    %v237 = vlaneseq
    %v238 = vshrl.u32 %v237, 7
    %v239 = vsub.s32 0, %v238
    %v240 = vrot.slane %v235, %v239
    %v246 = vunpack.c.l.b16 %v231
    %v247 = vunpack.c.l.b16 %v232
    %v248 = vunpack.c.l.b16 %v233
    %v249 = vunpack.c.l.b16 %v234
    %v250 = vpack.c.b16 %v247, %v246
    %v251 = vpack.c.b16 %v249, %v248
    %vm254 = vcmask 261120
    %v256 = vsel %vm254, %v230, 0
    %258 = vmatprep.subr.bf16.mxu0 0
    %259 = vmatpush1.bf16.msra.mxu0 %v250
    %260 = vmatprep.subr.bf16.mxu0 0
    %261 = vmatpush1.bf16.msra.mxu0 %v251
    %262 = vmatprep.subr.bf16.mxu0 0
    %263 = vmatpush1.bf16.msra.mxu0 0
    %264 = vmatprep.subr.bf16.mxu0 0
    %265 = vmatpush1.bf16.msra.mxu0 0
    %266 = vmatprep.subr.bf16.mxu0 0
    %267 = vmatpush1.bf16.msra.mxu0 0
    %268 = vmatprep.subr.bf16.mxu0 0
    %269 = vmatpush1.bf16.msra.mxu0 0
    %270 = vmatprep.subr.bf16.mxu0 0
    %271 = vmatpush1.bf16.msra.mxu0 0
    %272 = vmatprep.subr.bf16.mxu0 0
    %273 = vmatpush1.bf16.msra.mxu0 0
    %274 = vmatprep.subr.bf16.mxu0 0
    %275 = vmatpush1.bf16.msra.mxu0 0
    %276 = vmatprep.subr.bf16.mxu0 0
    %277 = vmatpush1.bf16.msra.mxu0 0
    %278 = vmatprep.subr.bf16.mxu0 0
    %279 = vmatpush1.bf16.msra.mxu0 0
    %280 = vmatprep.subr.bf16.mxu0 0
    %281 = vmatpush1.bf16.msra.mxu0 0
    %282 = vmatprep.subr.bf16.mxu0 0
    %283 = vmatpush1.bf16.msra.mxu0 0
    %284 = vmatprep.subr.bf16.mxu0 0
    %285 = vmatpush1.bf16.msra.mxu0 0
    %286 = vmatprep.subr.bf16.mxu0 0
    %287 = vmatpush1.bf16.msra.mxu0 0
    %288 = vmatprep.subr.bf16.mxu0 0
    %289 = vmatpush1.bf16.msra.mxu0 0
    %290 = vmatprep.mubr.bf16.mxu0 0
    %291 = vmatmul.mubr.bf16.gmra.mrb[0].mxu0 %v256
    %v292 = vpop.f32.mrb[0].mxu0
    %v293 = vadd.f32 %v240, %v292
    %v294 = vpop.f32.mrb[0].mxu0
    %v295 = vpop.f32.mrb[0].mxu0
    %v296 = vpop.f32.mrb[0].mxu0
    %297 = vdwg.mxu0
    %v298 = vtanh.pop %v293
    %v299 = vpack.c.bf16 %v298, %v298
    %v300 = vld [vmem:[%s5] sm:$0xf]
    %v301 = vld [vmem:[%s5 + $0x4] sm:$0xf]
    %v302 = vld [vmem:[%s6] sm:$0x1]
    %v304 = vlaneseq
    %v305 = vshrl.u32 %v304, 7
    %v306 = vsub.s32 0, %v305
    %v307 = vrot.slane %v302, %v306
    %v311 = vunpack.c.l.b16 %v300
    %v312 = vunpack.c.l.b16 %v301
    %v313 = vpack.c.b16 %v312, %v311
    %vm315 = vcmask 130048
    %v317 = vsel %vm315, %v299, 0
    %319 = vmatprep.subr.bf16.mxu0 0
    %320 = vmatpush1.bf16.msra.mxu0 %v313
    %321 = vmatprep.subr.bf16.mxu0 0
    %322 = vmatpush1.bf16.msra.mxu0 0
    %323 = vmatprep.subr.bf16.mxu0 0
    %324 = vmatpush1.bf16.msra.mxu0 0
    %325 = vmatprep.subr.bf16.mxu0 0
    %326 = vmatpush1.bf16.msra.mxu0 0
    %327 = vmatprep.subr.bf16.mxu0 0
    %328 = vmatpush1.bf16.msra.mxu0 0
    %329 = vmatprep.subr.bf16.mxu0 0
    %330 = vmatpush1.bf16.msra.mxu0 0
    %331 = vmatprep.subr.bf16.mxu0 0
    %332 = vmatpush1.bf16.msra.mxu0 0
    %333 = vmatprep.subr.bf16.mxu0 0
    %334 = vmatpush1.bf16.msra.mxu0 0
    %335 = vmatprep.subr.bf16.mxu0 0
    %336 = vmatpush1.bf16.msra.mxu0 0
    %337 = vmatprep.subr.bf16.mxu0 0
    %338 = vmatpush1.bf16.msra.mxu0 0
    %339 = vmatprep.subr.bf16.mxu0 0
    %340 = vmatpush1.bf16.msra.mxu0 0
    %341 = vmatprep.subr.bf16.mxu0 0
    %342 = vmatpush1.bf16.msra.mxu0 0
    %343 = vmatprep.subr.bf16.mxu0 0
    %344 = vmatpush1.bf16.msra.mxu0 0
    %345 = vmatprep.subr.bf16.mxu0 0
    %346 = vmatpush1.bf16.msra.mxu0 0
    %347 = vmatprep.subr.bf16.mxu0 0
    %348 = vmatpush1.bf16.msra.mxu0 0
    %349 = vmatprep.subr.bf16.mxu0 0
    %350 = vmatpush1.bf16.msra.mxu0 0
    %351 = vmatprep.mubr.bf16.mxu0 0
    %352 = vmatmul.mubr.bf16.gmra.mrb[0].mxu0 %v317
    %v353 = vpop.f32.mrb[0].mxu0
    %v354 = vadd.f32 %v307, %v353
    %v355 = vpop.f32.mrb[0].mxu0
    %v356 = vpop.f32.mrb[0].mxu0
    %v357 = vpop.f32.mrb[0].mxu0
    %358 = vdwg.mxu0
    %v359 = vtanh.pop %v354
    %v360 = vpack.c.bf16 %v359, %v359
    %v361 = vld [vmem:[%s7] sm:$0xff]
    %v362 = vld [vmem:[%s7 + $0x8] sm:$0xff]
    %v363 = vld [vmem:[%s7 + $0x10] sm:$0xff]
    %v364 = vld [vmem:[%s7 + $0x18] sm:$0xff]
    %v365 = vld [vmem:[%s8] sm:$0x3]
    %v367 = vlaneseq
    %v368 = vshrl.u32 %v367, 7
    %v369 = vsub.s32 0, %v368
    %v370 = vrot.slane %v365, %v369
    %v371 = vlaneseq
    %v372 = vshrl.u32 %v371, 7
    %v373 = vsub.s32 1, %v372
    %v374 = vrot.slane %v365, %v373
    %v381 = vunpack.c.l.b16 %v361
    %v382 = vunpack.c.h.b16 %v361
    %v383 = vunpack.c.l.b16 %v362
    %v384 = vunpack.c.h.b16 %v362
    %v385 = vunpack.c.l.b16 %v363
    %v386 = vunpack.c.h.b16 %v363
    %v387 = vunpack.c.l.b16 %v364
    %v388 = vunpack.c.h.b16 %v364
    %v389 = vpack.c.b16 %v383, %v381
    %v390 = vpack.c.b16 %v384, %v382
    %v391 = vpack.c.b16 %v387, %v385
    %v392 = vpack.c.b16 %v388, %v386
    %v398 = vsel %vm254, %v360, 0
    %400 = vmatprep.subr.bf16.mxu0 %v390
    %401 = vmatpush1.bf16.msra.mxu0 %v389
    %402 = vmatprep.subr.bf16.mxu0 %v392
    %403 = vmatpush1.bf16.msra.mxu0 %v391
    %404 = vmatprep.subr.bf16.mxu0 0
    %405 = vmatpush1.bf16.msra.mxu0 0
    %406 = vmatprep.subr.bf16.mxu0 0
    %407 = vmatpush1.bf16.msra.mxu0 0
    %408 = vmatprep.subr.bf16.mxu0 0
    %409 = vmatpush1.bf16.msra.mxu0 0
    %410 = vmatprep.subr.bf16.mxu0 0
    %411 = vmatpush1.bf16.msra.mxu0 0
    %412 = vmatprep.subr.bf16.mxu0 0
    %413 = vmatpush1.bf16.msra.mxu0 0
    %414 = vmatprep.subr.bf16.mxu0 0
    %415 = vmatpush1.bf16.msra.mxu0 0
    %416 = vmatprep.subr.bf16.mxu0 0
    %417 = vmatpush1.bf16.msra.mxu0 0
    %418 = vmatprep.subr.bf16.mxu0 0
    %419 = vmatpush1.bf16.msra.mxu0 0
    %420 = vmatprep.subr.bf16.mxu0 0
    %421 = vmatpush1.bf16.msra.mxu0 0
    %422 = vmatprep.subr.bf16.mxu0 0
    %423 = vmatpush1.bf16.msra.mxu0 0
    %424 = vmatprep.subr.bf16.mxu0 0
    %425 = vmatpush1.bf16.msra.mxu0 0
    %426 = vmatprep.subr.bf16.mxu0 0
    %427 = vmatpush1.bf16.msra.mxu0 0
    %428 = vmatprep.subr.bf16.mxu0 0
    %429 = vmatpush1.bf16.msra.mxu0 0
    %430 = vmatprep.subr.bf16.mxu0 0
    %431 = vmatpush1.bf16.msra.mxu0 0
    %432 = vmatprep.mubr.bf16.mxu0 0
    %433 = vmatmul.mubr.bf16.gmra.mrb[0].mxu0 %v398
    %v434 = vpop.f32.mrb[0].mxu0
    %v435 = vadd.f32 %v370, %v434
    %v436 = vpop.f32.mrb[0].mxu0
    %v437 = vadd.f32 %v374, %v436
    %v438 = vpop.f32.mrb[0].mxu0
    %v439 = vpop.f32.mrb[0].mxu0
    %440 = vdwg.mxu0
    %v441 = vmul.f32 %v435, %v48
    %v442 = vmul.f32 %v437, %v48
    %443 = vst [vmem:[#allocation2] sm:$0xff] %v441
    %444 = vst [vmem:[#allocation2 + $0x8] sm:$0xff] %v442
    // Predicated region
    $region38: #{tpu_custom_call.1} parent=1 // pred_check
      _
    $region39: #{tpu_custom_call.1} parent=1 // pred_check_branch
      %446 = sbr.rel (0) target = $region41
    $region40: #{tpu_custom_call.1} parent=1 // pred_region
      %s448 = ssub.s32 256, 256
      %449 = vsyncadd [#allocation3], %s448
      %s451 = sshll.u32 [#allocation2], 4
      %s452 = int_to_ptr.vmem [resolvable:$true] %s451
      %454 = dma.vmem_to_hbm [thread:$0]  %s452, 256, %s9, [#allocation3]
    $region41: #{tpu_custom_call.1} parent=1 // pred_fallthru
      _
    // Predicated region
    $region42: #{tpu_custom_call.1} parent=1 // pred_check
      _
    $region43: #{tpu_custom_call.1} parent=1 // pred_check_branch
      %456 = sbr.rel (0) target = $region45
    $region44: #{tpu_custom_call.1} parent=1 // pred_region
      %457 = dma.done [#allocation3], 256
    $region45: #{tpu_custom_call.1} parent=1 // pred_fallthru
      _
    %458 = vsyncpa [#allocation3], 1

</llo_original>
